<compile_context>
chip_gen: v5e
topology: v5e:2x2
jax: 0.10.0
libtpu: 0.0.40
codegen_flags: <defaults>
</compile_context>

<pallas_src>
import functools

import jax
import jax.numpy as jnp
from jax.experimental import pallas as pl
from jax.experimental.pallas import tpu as pltpu

_LANES = 128


def _round_up(x, m):
    return (x + m - 1) // m * m


def _pinball_kernel(q_ref, preds_ref, target_ref, out_ref, acc_ref, *,
                    rows_valid, half_tiles, block_rows):
    """Accumulate sum_n pinball(n, q) over one (Q, S, 128) tile of N."""
    c = pl.program_id(0)                       # core split of the row-tile range
    i = pl.program_id(1)                       # row-tile index within this core
    r0 = (c * half_tiles + i) * block_rows     # first global 128-col row of tile

    @pl.when(i == 0)
    def _():
        acc_ref[...] = jnp.zeros_like(acc_ref)

    def contribute(mask_rows):
        # Upcast inside the kernel: HBM traffic stays at the input dtype width.
        preds = preds_ref[...].astype(jnp.float32)            # (Q, S, 128)
        tgt = target_ref[...].astype(jnp.float32)             # (S, 128)
        errors = tgt[None, :, :] - preds                       # (Q, S, 128)
        q = q_ref[...].astype(jnp.float32)                     # (Q, 1, 1)
        # max((q-1)*e, q*e) == q*e - min(e, 0); same VALU count, one less operand.
        pinball = q * errors - jnp.minimum(errors, 0.0)
        if mask_rows:
            row = r0 + jax.lax.broadcasted_iota(jnp.int32, pinball.shape, 1)
            pinball = jnp.where(row < rows_valid, pinball, 0.0)
        # Per-step tree reduction over the sublane axis into a tiny accumulator.
        acc_ref[...] += jnp.sum(pinball, axis=1, keepdims=True)   # (Q, 1, 128)

    # Fast path: interior tile, fully in bounds -> no masking work at all.
    @pl.when(r0 + block_rows <= rows_valid)
    def _():
        contribute(False)

    # Boundary tile: mask garbage rows past the end of the (padded) array.
    @pl.when(jnp.logical_and(r0 < rows_valid, r0 + block_rows > rows_valid))
    def _():
        contribute(True)

    # Fully out-of-range (clamped duplicate) tiles contribute nothing.

    @pl.when(i == pl.num_programs(1) - 1)
    def _():
        out_ref[...] = acc_ref[...][None]                      # (1, Q, 1, 128)


def _pinball_sums_xla(preds_t, target, quantiles):
    """Pure-XLA per-quantile pinball sums (small-N fallback)."""
    errors = target[None, :].astype(jnp.float32) - preds_t.astype(jnp.float32)
    pinball = quantiles[:, None] * errors - jnp.minimum(errors, 0.0)
    return jnp.sum(pinball, axis=1)                            # (Q,)


def _default_num_cores():
    # Split the row-tile range across TensorCores only where a single JAX
    # device exposes two of them (v7x); v5e/v6e are 1 TC per device.
    try:
        kind = jax.devices()[0].device_kind.lower()
    except Exception:
        return 1
    return 2 if "v7" in kind else 1


def all_quantile_loss_t(preds_t, target, quantiles, *, block_rows=None,
                        num_cores=None, min_kernel_n=8192,
                        step_bytes=2 * 1024 * 1024):
    """Pinball loss from a lane-dense (Q, N) preds layout.

    preds_t:   (Q, N)  estimated labels, one row per quantile level
    target:    (N,)    true labels
    quantiles: (Q,)    quantile levels in (0, 1)
    Returns (loss, per_quantile_means) with
      loss            = mean_n( sum_q pinball(n, q) )
      per_quantile[q] = mean_n( pinball(n, q) )
    """
    preds_t = jnp.asarray(preds_t)
    Q, N = preds_t.shape
    quantiles = jnp.asarray(quantiles, dtype=jnp.float32).reshape(Q)
    target = jnp.asarray(target).reshape(N)

    if N < max(int(min_kernel_n), _LANES):
        # Tiny problems are pure launch/step overhead in a pallas_call.
        colsum = _pinball_sums_xla(preds_t, target, quantiles)
    else:
        # Pad N to a multiple of 128 so (Q, N) -> (Q, R, 128) is a free,
        # layout-preserving reshape.  Zero padding contributes exactly zero
        # pinball loss, so no lane masking is ever needed.
        Np = _round_up(N, _LANES)
        if Np != N:
            # One extra HBM pass; hot callers should supply 128-aligned N
            # (in the (N, Q) entry point below this fuses with the transpose).
            preds_t = jnp.pad(preds_t, ((0, 0), (0, Np - N)))
            target = jnp.pad(target, (0, Np - N))
        R = Np // _LANES
        preds3 = preds_t.reshape(Q, R, _LANES)
        target2 = target.reshape(R, _LANES)
        q3 = quantiles.reshape(Q, 1, 1)

        # Row-tile size: ~`step_bytes` of fresh input per grid step so the
        # fixed per-step overhead is negligible; multiple of 8 sublanes,
        # capped at the whole array.
        itemsize = jnp.dtype(preds3.dtype).itemsize
        t_itemsize = jnp.dtype(target2.dtype).itemsize
        per_row_bytes = _LANES * (Q * itemsize + t_itemsize)
        if block_rows is None:
            S = max(8, (int(step_bytes) // per_row_bytes) // 8 * 8)
        else:
            S = max(8, _round_up(int(block_rows), 8))
        S = min(S, _round_up(R, 8))

        num_tiles = pl.cdiv(R, S)
        if num_cores is None:
            num_cores = _default_num_cores()
        num_cores = max(1, min(int(num_cores), num_tiles))
        half_tiles = pl.cdiv(num_tiles, num_cores)
        last_tile = num_tiles - 1

        def _row_map(c, i):
            # Clamp so no DMA starts out of bounds; clamped duplicate tiles are
            # skipped inside the kernel (fully out-of-range -> no contribution)
            # and, being repeats of the previous block index, are not re-DMA'd.
            return (jnp.minimum(c * half_tiles + i, last_tile), 0)

        def _tile_map(c, i):
            return (0,) + _row_map(c, i)

        partial = pl.pallas_call(
            functools.partial(_pinball_kernel, rows_valid=R,
                              half_tiles=half_tiles, block_rows=S),
            out_shape=jax.ShapeDtypeStruct((num_cores, Q, 1, _LANES),
                                           jnp.float32),
            grid_spec=pltpu.PrefetchScalarGridSpec(
                num_scalar_prefetch=0,
                grid=(num_cores, half_tiles),
                in_specs=[
                    pl.BlockSpec((Q, 1, 1), lambda c, i: (0, 0, 0)),   # q levels
                    pl.BlockSpec((Q, S, _LANES), _tile_map),           # preds
                    pl.BlockSpec((S, _LANES), _row_map),               # target
                ],
                out_specs=pl.BlockSpec((1, Q, 1, _LANES),
                                       lambda c, i: (c, 0, 0, 0)),
                scratch_shapes=[pltpu.VMEM((Q, 1, _LANES), jnp.float32)],
            ),
            compiler_params=pltpu.CompilerParams(
                dimension_semantics=("parallel", "arbitrary"),
                vmem_limit_bytes=32 * 1024 * 1024,
            ),
        )(q3, preds3, target2)

        colsum = jnp.sum(partial, axis=(0, 2, 3))                  # (Q,)

    per_quantile_mean = colsum / N                                  # losses_sep
    loss = jnp.sum(colsum) / N                                      # mean_n(sum_q)
    return loss, per_quantile_mean


def all_quantile_loss(preds, inputs, target, quantiles, **kwargs):
    """Module-compatible entry point: forward(preds, inputs, target).

    preds is (N, Q) like the PyTorch code; `inputs` is accepted and ignored,
    exactly as in AllQuantileLoss.forward.  One XLA transpose(+pad) pass gets
    the lane-dense (Q, N) layout; hot callers should keep preds as (Q, N) and
    call all_quantile_loss_t directly.
    """
    del inputs  # unused by the forward pass, matching the PyTorch module
    preds = jnp.asarray(preds)
    target = jnp.asarray(target).reshape(-1)
    return all_quantile_loss_t(preds.T, target, quantiles, **kwargs)


def _reference(preds, target, quantiles):
    # Pure-JAX reference mirroring the PyTorch loop.
    errors = target[:, None] - preds                               # (N, Q)
    q = quantiles[None, :]
    pinball = jnp.maximum((q - 1.0) * errors, q * errors)          # (N, Q)
    loss = jnp.mean(jnp.sum(pinball, axis=1))
    per_q = jnp.mean(pinball, axis=0)
    return loss, per_q


if __name__ == "__main__":
    base_key = jax.random.PRNGKey(0)
    Q = 5
    quantiles = jnp.array([0.05, 0.25, 0.5, 0.75, 0.95], dtype=jnp.float32)

    # Three configs:
    #  * N=300   -> small-N pure-XLA fallback path
    #  * N=8200  -> kernel path with forced small tiles + 2-core split:
    #               multi-tile, padded tail columns, boundary row mask,
    #               fully-out-of-range duplicate tile
    #  * N=16384 -> kernel path with default (large) tiles, no masking
    configs = [
        (300, dict()),
        (8200, dict(min_kernel_n=1024, block_rows=8, num_cores=2)),
        (16384, dict(min_kernel_n=1024)),
    ]

    per_q = None
    for N, kw in configs:
        kp, kt, ki = jax.random.split(jax.random.fold_in(base_key, N), 3)
        preds = jax.random.normal(kp, (N, Q), dtype=jnp.float32)
        target = jax.random.normal(kt, (N,), dtype=jnp.float32)
        inputs = jax.random.normal(ki, (N, 4), dtype=jnp.float32)  # unused, as in PyTorch

        loss, per_q = all_quantile_loss(preds, inputs, target, quantiles, **kw)
        jax.block_until_ready((loss, per_q))

        ref_loss, ref_per_q = _reference(preds, target, quantiles)
        assert jnp.allclose(loss, ref_loss, rtol=1e-5, atol=1e-5), (N, loss, ref_loss)
        assert jnp.allclose(per_q, ref_per_q, rtol=1e-5, atol=1e-5), (N, per_q, ref_per_q)

    # losses_sep dict keyed by quantile level, like the PyTorch module
    losses_sep = {float(q): float(v) for q, v in zip(quantiles, per_q)}
    _ = losses_sep

    print("KERNEL_OK")
</pallas_src>

<mosaic_0001>
module attributes {stable_mosaic.version = 11 : i64} {
  func.func @_pinball_kernel(%arg0: i32, %arg1: i32, %arg2: memref<5x1x1xf32, #tpu.memory_space<vmem>>, %arg3: memref<5x8x128xf32, #tpu.memory_space<vmem>>, %arg4: memref<8x128xf32, #tpu.memory_space<vmem>>, %arg5: memref<1x5x1x128xf32, #tpu.memory_space<vmem>>, %arg6: memref<5x1x128xf32, #tpu.memory_space<vmem>>) attributes {dimension_semantics = [#tpu.dimension_semantics<parallel>, #tpu.dimension_semantics<arbitrary>], iteration_bounds = array<i64: 2, 5>, scalar_prefetch = 0 : i64, scratch_operands = 1 : i64, tpu.core_type = #tpu.core_type<tc>, window_params = [{pipeline_mode = #tpu.pipeline_mode<synchronous>, transform_indices = @transform_0, window_bounds = array<i64: 5, 1, 1>}, {transform_indices = @transform_1, window_bounds = array<i64: 5, 8, 128>}, {transform_indices = @transform_2, window_bounds = array<i64: 8, 128>}, {transform_indices = @transform_3, window_bounds = array<i64: 1, 5, 1, 128>}]} {
    %c5_i32 = arith.constant 5 : i32
    %0 = arith.muli %arg0, %c5_i32 : i32
    %1 = arith.addi %0, %arg1 : i32
    %c8_i32 = arith.constant 8 : i32
    %2 = arith.muli %1, %c8_i32 : i32
    %c0_i32 = arith.constant 0 : i32
    %3 = arith.cmpi eq, %arg1, %c0_i32 : i32
    %4 = arith.extui %3 : i1 to i32
    %c0_i32_0 = arith.constant 0 : i32
    %5 = arith.cmpi ne, %4, %c0_i32_0 : i32
    scf.if %5 {
      %cst = arith.constant 0.000000e+00 : f32
      %19 = vector.broadcast %cst : f32 to vector<5x1x128xf32>
      %c0 = arith.constant 0 : index
      %c0_8 = arith.constant 0 : index
      %c0_9 = arith.constant 0 : index
      %20 = vector.load %arg6[%c0, %c0_8, %c0_9] : memref<5x1x128xf32, #tpu.memory_space<vmem>>, vector<5x1x128xf32>
      tpu.vector_store %arg6[%c0, %c0_8, %c0_9], %19 {strides = array<i32>} : memref<5x1x128xf32, #tpu.memory_space<vmem>>, vector<5x1x128xf32>,
    } else {
    }
    %c8_i32_1 = arith.constant 8 : i32
    %6 = arith.addi %2, %c8_i32_1 : i32
    %c65_i32 = arith.constant 65 : i32
    %7 = arith.cmpi sle, %6, %c65_i32 : i32
    %8 = arith.extui %7 : i1 to i32
    %c0_i32_2 = arith.constant 0 : i32
    %9 = arith.cmpi ne, %8, %c0_i32_2 : i32
    scf.if %9 {
      %c0 = arith.constant 0 : index
      %c0_8 = arith.constant 0 : index
      %c0_9 = arith.constant 0 : index
      %19 = vector.load %arg3[%c0, %c0_8, %c0_9] : memref<5x8x128xf32, #tpu.memory_space<vmem>>, vector<5x8x128xf32>
      %c0_10 = arith.constant 0 : index
      %c0_11 = arith.constant 0 : index
      %20 = vector.load %arg4[%c0_10, %c0_11] : memref<8x128xf32, #tpu.memory_space<vmem>>, vector<8x128xf32>
      %21 = vector.shape_cast %20 : vector<8x128xf32> to vector<1x8x128xf32>
      %22 = vector.broadcast %21 : vector<1x8x128xf32> to vector<5x8x128xf32>
      %23 = arith.subf %22, %19 : vector<5x8x128xf32>
      %c0_12 = arith.constant 0 : index
      %c0_13 = arith.constant 0 : index
      %c0_14 = arith.constant 0 : index
      %24 = vector.load %arg2[%c0_12, %c0_13, %c0_14] : memref<5x1x1xf32, #tpu.memory_space<vmem>>, vector<5x1x1xf32>
      %25 = vector.broadcast %24 : vector<5x1x1xf32> to vector<5x8x128xf32>
      %26 = arith.mulf %25, %23 : vector<5x8x128xf32>
      %cst = arith.constant 0.000000e+00 : f32
      %27 = vector.broadcast %cst : f32 to vector<5x8x128xf32>
      %28 = arith.minimumf %23, %27 : vector<5x8x128xf32>
      %29 = arith.subf %26, %28 : vector<5x8x128xf32>
      %c0_15 = arith.constant 0 : index
      %c0_16 = arith.constant 0 : index
      %c0_17 = arith.constant 0 : index
      %30 = vector.load %arg6[%c0_15, %c0_16, %c0_17] : memref<5x1x128xf32, #tpu.memory_space<vmem>>, vector<5x1x128xf32>
      %cst_18 = arith.constant dense<0.000000e+00> : vector<5x128xf32>
      %31 = vector.multi_reduction <add>, %29, %cst_18 [1] : vector<5x8x128xf32> to vector<5x128xf32>
      %32 = vector.shape_cast %31 : vector<5x128xf32> to vector<5x1x128xf32>
      %33 = arith.addf %30, %32 : vector<5x1x128xf32>
      %c0_19 = arith.constant 0 : index
      %c0_20 = arith.constant 0 : index
      %c0_21 = arith.constant 0 : index
      %34 = vector.load %arg6[%c0_19, %c0_20, %c0_21] : memref<5x1x128xf32, #tpu.memory_space<vmem>>, vector<5x1x128xf32>
      tpu.vector_store %arg6[%c0_19, %c0_20, %c0_21], %33 {strides = array<i32>} : memref<5x1x128xf32, #tpu.memory_space<vmem>>, vector<5x1x128xf32>,
    } else {
    }
    %c65_i32_3 = arith.constant 65 : i32
    %10 = arith.cmpi slt, %2, %c65_i32_3 : i32
    %c8_i32_4 = arith.constant 8 : i32
    %11 = arith.addi %2, %c8_i32_4 : i32
    %c65_i32_5 = arith.constant 65 : i32
    %12 = arith.cmpi sgt, %11, %c65_i32_5 : i32
    %13 = arith.andi %10, %12 : i1
    %14 = arith.extui %13 : i1 to i32
    %c0_i32_6 = arith.constant 0 : i32
    %15 = arith.cmpi ne, %14, %c0_i32_6 : i32
    scf.if %15 {
      %c0 = arith.constant 0 : index
      %c0_8 = arith.constant 0 : index
      %c0_9 = arith.constant 0 : index
      %19 = vector.load %arg3[%c0, %c0_8, %c0_9] : memref<5x8x128xf32, #tpu.memory_space<vmem>>, vector<5x8x128xf32>
      %c0_10 = arith.constant 0 : index
      %c0_11 = arith.constant 0 : index
      %20 = vector.load %arg4[%c0_10, %c0_11] : memref<8x128xf32, #tpu.memory_space<vmem>>, vector<8x128xf32>
      %21 = vector.shape_cast %20 : vector<8x128xf32> to vector<1x8x128xf32>
      %22 = vector.broadcast %21 : vector<1x8x128xf32> to vector<5x8x128xf32>
      %23 = arith.subf %22, %19 : vector<5x8x128xf32>
      %c0_12 = arith.constant 0 : index
      %c0_13 = arith.constant 0 : index
      %c0_14 = arith.constant 0 : index
      %24 = vector.load %arg2[%c0_12, %c0_13, %c0_14] : memref<5x1x1xf32, #tpu.memory_space<vmem>>, vector<5x1x1xf32>
      %25 = vector.broadcast %24 : vector<5x1x1xf32> to vector<5x8x128xf32>
      %26 = arith.mulf %25, %23 : vector<5x8x128xf32>
      %cst = arith.constant 0.000000e+00 : f32
      %27 = vector.broadcast %cst : f32 to vector<5x8x128xf32>
      %28 = arith.minimumf %23, %27 : vector<5x8x128xf32>
      %29 = arith.subf %26, %28 : vector<5x8x128xf32>
      %30 = tpu.iota {dimensions = array<i32: 1>} : vector<5x8x128xi32>
      %31 = vector.broadcast %2 : i32 to vector<5x8x128xi32>
      %32 = arith.addi %31, %30 : vector<5x8x128xi32>
      %c65_i32_15 = arith.constant 65 : i32
      %33 = vector.broadcast %c65_i32_15 : i32 to vector<5x8x128xi32>
      %34 = arith.cmpi slt, %32, %33 : vector<5x8x128xi32>
      %cst_16 = arith.constant 0.000000e+00 : f32
      %35 = vector.broadcast %cst_16 : f32 to vector<5x8x128xf32>
      %36 = arith.select %34, %29, %35 : vector<5x8x128xi1>, vector<5x8x128xf32>
      %c0_17 = arith.constant 0 : index
      %c0_18 = arith.constant 0 : index
      %c0_19 = arith.constant 0 : index
      %37 = vector.load %arg6[%c0_17, %c0_18, %c0_19] : memref<5x1x128xf32, #tpu.memory_space<vmem>>, vector<5x1x128xf32>
      %cst_20 = arith.constant dense<0.000000e+00> : vector<5x128xf32>
      %38 = vector.multi_reduction <add>, %36, %cst_20 [1] : vector<5x8x128xf32> to vector<5x128xf32>
      %39 = vector.shape_cast %38 : vector<5x128xf32> to vector<5x1x128xf32>
      %40 = arith.addf %37, %39 : vector<5x1x128xf32>
      %c0_21 = arith.constant 0 : index
      %c0_22 = arith.constant 0 : index
      %c0_23 = arith.constant 0 : index
      %41 = vector.load %arg6[%c0_21, %c0_22, %c0_23] : memref<5x1x128xf32, #tpu.memory_space<vmem>>, vector<5x1x128xf32>
      tpu.vector_store %arg6[%c0_21, %c0_22, %c0_23], %40 {strides = array<i32>} : memref<5x1x128xf32, #tpu.memory_space<vmem>>, vector<5x1x128xf32>,
    } else {
    }
    %c4_i32 = arith.constant 4 : i32
    %16 = arith.cmpi eq, %arg1, %c4_i32 : i32
    %17 = arith.extui %16 : i1 to i32
    %c0_i32_7 = arith.constant 0 : i32
    %18 = arith.cmpi ne, %17, %c0_i32_7 : i32
    scf.if %18 {
      %c0 = arith.constant 0 : index
      %c0_8 = arith.constant 0 : index
      %c0_9 = arith.constant 0 : index
      %19 = vector.load %arg6[%c0, %c0_8, %c0_9] : memref<5x1x128xf32, #tpu.memory_space<vmem>>, vector<5x1x128xf32>
      %20 = vector.shape_cast %19 : vector<5x1x128xf32> to vector<1x5x1x128xf32>
      %c0_10 = arith.constant 0 : index
      %c0_11 = arith.constant 0 : index
      %c0_12 = arith.constant 0 : index
      %c0_13 = arith.constant 0 : index
      %21 = vector.load %arg5[%c0_10, %c0_11, %c0_12, %c0_13] : memref<1x5x1x128xf32, #tpu.memory_space<vmem>>, vector<1x5x1x128xf32>
      tpu.vector_store %arg5[%c0_10, %c0_11, %c0_12, %c0_13], %20 {strides = array<i32>} : memref<1x5x1x128xf32, #tpu.memory_space<vmem>>, vector<1x5x1x128xf32>,
    } else {
    }
    return
  }
  func.func @transform_0(%arg0: i32, %arg1: i32) -> (i32, i32, i32) {
    %c0_i32 = arith.constant 0 : i32
    %c0_i32_0 = arith.constant 0 : i32
    %c0_i32_1 = arith.constant 0 : i32
    %c0_i32_2 = arith.constant 0 : i32
    return %c0_i32, %c0_i32_0, %c0_i32_1 : i32, i32, i32
  }
  func.func @transform_1(%arg0: i32, %arg1: i32) -> (i32, i32, i32) {
    %c5_i32 = arith.constant 5 : i32
    %0 = arith.muli %arg0, %c5_i32 : i32
    %1 = arith.addi %0, %arg1 : i32
    %c8_i32 = arith.constant 8 : i32
    %2 = arith.minsi %1, %c8_i32 : i32
    %c0_i32 = arith.constant 0 : i32
    %c0_i32_0 = arith.constant 0 : i32
    %c0_i32_1 = arith.constant 0 : i32
    return %c0_i32, %2, %c0_i32_0 : i32, i32, i32
  }
  func.func @transform_2(%arg0: i32, %arg1: i32) -> (i32, i32) {
    %c5_i32 = arith.constant 5 : i32
    %0 = arith.muli %arg0, %c5_i32 : i32
    %1 = arith.addi %0, %arg1 : i32
    %c8_i32 = arith.constant 8 : i32
    %2 = arith.minsi %1, %c8_i32 : i32
    %c0_i32 = arith.constant 0 : i32
    %c0_i32_0 = arith.constant 0 : i32
    return %2, %c0_i32 : i32, i32
  }
  func.func @transform_3(%arg0: i32, %arg1: i32) -> (i32, i32, i32, i32) {
    %c0_i32 = arith.constant 0 : i32
    %c0_i32_0 = arith.constant 0 : i32
    %c0_i32_1 = arith.constant 0 : i32
    %c0_i32_2 = arith.constant 0 : i32
    return %arg0, %c0_i32, %c0_i32_0, %c0_i32_1 : i32, i32, i32, i32
  }
}

</mosaic_0001>

<llo_original>
// kernel: tpu_custom_call.1
$region0: #{tpu_custom_call.1}
  #allocation0 [shape = 'u32[]', space=smem, size = 0x4, offset = 0x4, fixed_abs, tag = 'smem constant byte address 0x4 - core index']
  #allocation1 [shape = 'u32[72,128]{1,0:T(1,128)}', space=vmem, size = 0x9000, scoped, tag = 'internal scratch']
  #allocation2 [shape = 'f32[5,1,128]{2,1,0:T(1,128)}', space=vmem, size = 0xa00, scoped, tag = 'scratch operand']
  %s0 = inlined_call_operand.vmem [shape: f32[5,1,1], index: 0, kind: input, shape index: {}]
  %s1 = inlined_call_operand.hbm [shape: f32[5,65,128], index: 1, kind: input, shape index: {}]
  %s2 = inlined_call_operand.hbm [shape: f32[65,128], index: 2, kind: input, shape index: {}]
  %s3 = inlined_call_operand.hbm [shape: f32[2,5,1,128], index: 3, kind: output, shape index: {}]
  %s4 = sld [smem:[#allocation0]]
  $region69: #{tpu_custom_call.1} parent=0
    _
  %s6 = ssub.s32 1, %s4
  %s7 = scalar_select 0, %s6, %s4
  $region1: #{tpu_custom_call.1} parent=0
    #allocation3 [shape = 'u8[40960]{0}', space=vmem, size = 0xa000, scoped, tag = 'input window, operand 1']
    #allocation4 [shape = 's32[2]{0}', space=sflag, size = 0x8, scoped, tag = 'scoped memory for tpu_custom_call.1']
    #allocation5 [shape = 's32[2]{0}', space=sflag, size = 0x8, scoped, tag = 'scoped memory for tpu_custom_call.1']
    #allocation6 [shape = 'u8[8192]{0}', space=vmem, size = 0x2000, scoped, tag = 'input window, operand 2']
    #allocation7 [shape = 's32[2]{0}', space=sflag, size = 0x8, scoped, tag = 'scoped memory for tpu_custom_call.1']
    #allocation8 [shape = 'u8[5120]{0}', space=vmem, size = 0x1400, scoped, tag = 'output window, operand 0']
    %8 = vsyncpa [#allocation4], 0
    %s9 = scalar_lea.sflag [#allocation4], 1
    %10 = vsyncpa %s9, 0
    %11 = vsyncpa [#allocation7], 0
    %s12 = scalar_lea.sflag [#allocation7], 1
    %13 = vsyncpa %s12, 0
    %14 = vsyncpa [#allocation5], 0
    %s15 = scalar_lea.sflag [#allocation5], 1
    %16 = vsyncpa %s15, 0
    loop: start=0, step=1, limit=12
    $region2: #{tpu_custom_call.1} parent=1 // loop_pre_header
      _
    $region3: #{tpu_custom_call.1} parent=1 // loop_header
      %s18 = sphi 0, %s22
      %p19 = scmp.ge.s32.totalorder %s18, 12
      %s25 = sphi 0, %s37
      %s26 = sphi 0, %s33
      %s27 = sphi 0, %s25
      %s28 = sphi 0, %s26
      %s29 = sphi 0, %s27
      %s30 = sphi 0, %s28
      %s38 = sphi 0, %s38
      %s40 = sphi 0, %s38
      %s41 = sphi 0, %s40
      %s55 = sphi 0, %s41
      %s69 = sphi 0, %s71
      %s72 = sphi 0, %s69
      %s73 = sphi 0, %s72
      %s89 = sphi 0, %s73
      %s103 = sphi 0, %s105
      %s106 = sphi 0, %s103
      %s107 = sphi 0, %s106
      %s123 = sphi 0, %s107
      %s129 = sphi 0, %s131
      %s132 = sphi 0, %s129
      %s133 = sphi 0, %s132
      %s149 = sphi 0, %s133
    $region4: #{tpu_custom_call.1} parent=1 // loop_header_branch
      %21 = sbr.rel (%p19) target = $region8
    $region5: #{tpu_custom_call.1} parent=1 // loop_body
      %s23 = ssub.s32 %s18, 1
      %s24 = ssub.s32 %s18, 2
      %s31 = sadd.s32 1, %s26
      %p32 = scmp.ge.s32.totalorder %s31, 5
      %s33 = scalar_select %p32, 0, %s31
      %s34 = sadd.s32 1, %s25
      %s35 = scalar_select %p32, %s34, %s25
      %p36 = scmp.ge.s32.totalorder %s35, 2
      %s37 = scalar_select %p36, 0, %s35
      %s39 = sadd.s32 %s38, 1
      %p42 = scmp.eq.s32.totalorder %s18, 9
      %p43 = scmp.ne.s32.totalorder %s38, %s40
      %p44 = scmp.eq.s32.totalorder %s18, 0
      %p45 = por %p43, %p44
      %p46 = scmp.ne.s32.totalorder %s38, %s40
      %p47 = scmp.eq.s32.totalorder %s23, 9
      %p48 = por %p46, %p47
      %p49 = scmp.ne.s32.totalorder %s40, %s41
      %p50 = scmp.eq.s32.totalorder %s23, 0
      %p51 = por %p49, %p50
      %p52 = scmp.ne.s32.totalorder %s40, %s41
      %p53 = scmp.eq.s32.totalorder %s24, 9
      %p54 = por %p52, %p53
      %p56 = scmp.ne.s32.totalorder %s41, %s55
      %p57 = scmp.eq.s32.totalorder %s24, 0
      %p58 = por %p56, %p57
      %s59 = smul.u32 %s25, 5
      %s60 = sadd.s32 %s59, %s26
      %p61 = scmp.lt.s32.totalorder %s60, 8
      %s62 = scalar_select %p61, %s60, 8
      %s63 = smul.u32 %s37, 5
      %s64 = sadd.s32 %s63, %s33
      %p65 = scmp.lt.s32.totalorder %s64, 8
      %s66 = scalar_select %p65, %s64, 8
      %s67 = ssub.s32 %s62, %s66
      %p68 = scmp.eq.s32.totalorder %s67, 0
      %s70 = sadd.s32 %s69, 1
      %s71 = scalar_select %p68, %s69, %s70
      %p74 = pneg %p68
      %p75 = scmp.eq.s32.totalorder %s18, 9
      %p76 = por %p74, %p75
      %p77 = scmp.ne.s32.totalorder %s69, %s72
      %p78 = scmp.eq.s32.totalorder %s18, 0
      %p79 = por %p77, %p78
      %p80 = scmp.ne.s32.totalorder %s69, %s72
      %p81 = scmp.eq.s32.totalorder %s23, 9
      %p82 = por %p80, %p81
      %p83 = scmp.ne.s32.totalorder %s72, %s73
      %p84 = scmp.eq.s32.totalorder %s23, 0
      %p85 = por %p83, %p84
      %p86 = scmp.ne.s32.totalorder %s72, %s73
      %p87 = scmp.eq.s32.totalorder %s24, 9
      %p88 = por %p86, %p87
      %p90 = scmp.ne.s32.totalorder %s73, %s89
      %p91 = scmp.eq.s32.totalorder %s24, 0
      %p92 = por %p90, %p91
      %s93 = smul.u32 %s25, 5
      %s94 = sadd.s32 %s93, %s26
      %p95 = scmp.lt.s32.totalorder %s94, 8
      %s96 = scalar_select %p95, %s94, 8
      %s97 = smul.u32 %s37, 5
      %s98 = sadd.s32 %s97, %s33
      %p99 = scmp.lt.s32.totalorder %s98, 8
      %s100 = scalar_select %p99, %s98, 8
      %s101 = ssub.s32 %s96, %s100
      %p102 = scmp.eq.s32.totalorder %s101, 0
      %s104 = sadd.s32 %s103, 1
      %s105 = scalar_select %p102, %s103, %s104
      %p108 = pneg %p102
      %p109 = scmp.eq.s32.totalorder %s18, 9
      %p110 = por %p108, %p109
      %p111 = scmp.ne.s32.totalorder %s103, %s106
      %p112 = scmp.eq.s32.totalorder %s18, 0
      %p113 = por %p111, %p112
      %p114 = scmp.ne.s32.totalorder %s103, %s106
      %p115 = scmp.eq.s32.totalorder %s23, 9
      %p116 = por %p114, %p115
      %p117 = scmp.ne.s32.totalorder %s106, %s107
      %p118 = scmp.eq.s32.totalorder %s23, 0
      %p119 = por %p117, %p118
      %p120 = scmp.ne.s32.totalorder %s106, %s107
      %p121 = scmp.eq.s32.totalorder %s24, 9
      %p122 = por %p120, %p121
      %p124 = scmp.ne.s32.totalorder %s107, %s123
      %p125 = scmp.eq.s32.totalorder %s24, 0
      %p126 = por %p124, %p125
      %s127 = ssub.s32 %s25, %s37
      %p128 = scmp.eq.s32.totalorder %s127, 0
      %s130 = sadd.s32 %s129, 1
      %s131 = scalar_select %p128, %s129, %s130
      %p134 = pneg %p128
      %p135 = scmp.eq.s32.totalorder %s18, 9
      %p136 = por %p134, %p135
      %p137 = scmp.ne.s32.totalorder %s129, %s132
      %p138 = scmp.eq.s32.totalorder %s18, 0
      %p139 = por %p137, %p138
      %p140 = scmp.ne.s32.totalorder %s129, %s132
      %p141 = scmp.eq.s32.totalorder %s23, 9
      %p142 = por %p140, %p141
      %p143 = scmp.ne.s32.totalorder %s132, %s133
      %p144 = scmp.eq.s32.totalorder %s23, 0
      %p145 = por %p143, %p144
      %p146 = scmp.ne.s32.totalorder %s132, %s133
      %p147 = scmp.eq.s32.totalorder %s24, 9
      %p148 = por %p146, %p147
      %p150 = scmp.ne.s32.totalorder %s133, %s149
      %p151 = scmp.eq.s32.totalorder %s24, 0
      %p152 = por %p150, %p151
      %p153 = scmp.le.s32.totalorder 1, %s18
      %p154 = scmp.lt.s32.totalorder %s18, 11
      %p155 = pnand %p153, %p154
      %p156 = pneg %p155
      // Predicated region
      $region9: #{tpu_custom_call.1} parent=5 // pred_check
        _
      $region10: #{tpu_custom_call.1} parent=5 // pred_check_branch
        %158 = sbr.rel (%p155) target = $region12
      $region11: #{tpu_custom_call.1} parent=5 // pred_region
        %s159 = ssub.s32 %s18, 1
        // Predicated region
        $region13: #{tpu_custom_call.1} parent=11 // pred_check
          %p160 = pneg %p51
        $region14: #{tpu_custom_call.1} parent=11 // pred_check_branch
          %162 = sbr.rel (%p160) target = $region16
        $region15: #{tpu_custom_call.1} parent=11 // pred_region
          _
        $region16: #{tpu_custom_call.1} parent=11 // pred_fallthru
          _
      $region12: #{tpu_custom_call.1} parent=5 // pred_fallthru
        _
      %p163 = scmp.lt.s32.totalorder %s18, 10
      // Predicated region
      $region17: #{tpu_custom_call.1} parent=5 // pred_check
        %p164 = pneg %p163
      $region18: #{tpu_custom_call.1} parent=5 // pred_check_branch
        %166 = sbr.rel (%p164) target = $region20
      $region19: #{tpu_custom_call.1} parent=5 // pred_region
        // Predicated region
        $region21: #{tpu_custom_call.1} parent=19 // pred_check
          %p167 = pneg %p79
        $region22: #{tpu_custom_call.1} parent=19 // pred_check_branch
          %169 = sbr.rel (%p167) target = $region24
        $region23: #{tpu_custom_call.1} parent=19 // pred_region
          %s170 = sand.u32 %s69, 1
          %s171 = scalar_lea.sflag [#allocation4], %s170
          %s172 = sand.u32 %s69, 1
          %s173 = smul.addr %s172, 40
          %s174 = scalar_lea.vmem [#allocation3], %s173
          %s175 = smul.u32 %s25, 5
          %s176 = sadd.s32 %s175, %s26
          %p177 = scmp.lt.s32.totalorder %s176, 8
          %s178 = scalar_select %p177, %s176, 8
          %180 = vsyncadd %s171, 0
          %s181 = smul.addr %s178, 8
          %s182 = scalar_lea.hbm %s1, %s181
          %s183 = sshll.u32 %s182, 4
          %s184 = int_to_ptr.hbm [resolvable:$true] %s183
          %s185 = sshll.u32 %s174, 4
          %s186 = int_to_ptr.vmem [resolvable:$true] %s185
          %191 = dma.hbm_to_vmem [thread:$0]  %s184, 640, %s186, %s171, 1152, 128, 8
        $region24: #{tpu_custom_call.1} parent=19 // pred_fallthru
          _
        // Predicated region
        $region25: #{tpu_custom_call.1} parent=19 // pred_check
          %p192 = pneg %p113
        $region26: #{tpu_custom_call.1} parent=19 // pred_check_branch
          %194 = sbr.rel (%p192) target = $region28
        $region27: #{tpu_custom_call.1} parent=19 // pred_region
          %s195 = sand.u32 %s103, 1
          %s196 = scalar_lea.sflag [#allocation7], %s195
          %s197 = sand.u32 %s103, 1
          %s198 = smul.addr %s197, 8
          %s199 = scalar_lea.vmem [#allocation6], %s198
          %s200 = smul.u32 %s25, 5
          %s201 = sadd.s32 %s200, %s26
          %p202 = scmp.lt.s32.totalorder %s201, 8
          %s203 = scalar_select %p202, %s201, 8
          %205 = vsyncadd %s196, 0
          %s206 = smul.addr %s203, 8
          %s207 = scalar_lea.hbm %s2, %s206
          %s209 = sshll.u32 %s207, 4
          %s210 = int_to_ptr.hbm [resolvable:$true] %s209
          %s211 = sshll.u32 %s199, 4
          %s212 = int_to_ptr.vmem [resolvable:$true] %s211
          %214 = dma.hbm_to_vmem [thread:$0]  %s210, 128, %s212, %s196
        $region28: #{tpu_custom_call.1} parent=19 // pred_fallthru
          _
      $region20: #{tpu_custom_call.1} parent=5 // pred_fallthru
        _
      %p215 = scmp.le.s32.totalorder 1, %s18
      %p216 = scmp.lt.s32.totalorder %s18, 11
      %p217 = pnand %p215, %p216
      %p218 = pneg %p217
      // Predicated region
      $region29: #{tpu_custom_call.1} parent=5 // pred_check
        _
      $region30: #{tpu_custom_call.1} parent=5 // pred_check_branch
        %220 = sbr.rel (%p217) target = $region32
      $region31: #{tpu_custom_call.1} parent=5 // pred_region
        %s221 = ssub.s32 %s18, 1
        %s222 = sand.u32 %s72, 1
        %s223 = scalar_lea.sflag [#allocation4], %s222
        %s224 = sand.u32 %s72, 1
        %s225 = smul.addr %s224, 40
        %s226 = scalar_lea.vmem [#allocation3], %s225
        // Predicated region
        $region33: #{tpu_custom_call.1} parent=31 // pred_check
          %p227 = pneg %p85
        $region34: #{tpu_custom_call.1} parent=31 // pred_check_branch
          %229 = sbr.rel (%p227) target = $region36
        $region35: #{tpu_custom_call.1} parent=31 // pred_region
          %231 = dma.done %s223, 640
        $region36: #{tpu_custom_call.1} parent=31 // pred_fallthru
          _
        %s232 = sand.u32 %s106, 1
        %s233 = scalar_lea.sflag [#allocation7], %s232
        %s234 = sand.u32 %s106, 1
        %s235 = smul.addr %s234, 8
        %s236 = scalar_lea.vmem [#allocation6], %s235
        // Predicated region
        $region37: #{tpu_custom_call.1} parent=31 // pred_check
          %p237 = pneg %p119
        $region38: #{tpu_custom_call.1} parent=31 // pred_check_branch
          %239 = sbr.rel (%p237) target = $region40
        $region39: #{tpu_custom_call.1} parent=31 // pred_region
          %241 = dma.done %s233, 128
        $region40: #{tpu_custom_call.1} parent=31 // pred_fallthru
          _
        %p242 = pneg %p51
        %p243 = pneg %p48
        %s244 = sand.u32 %s72, 1
        %s245 = scalar_lea.sflag [#allocation4], %s244
        %s246 = sand.u32 %s72, 1
        %s247 = smul.addr %s246, 40
        %s248 = scalar_lea.vmem [#allocation3], %s247
        %p249 = pneg %p85
        %p250 = pneg %p82
        %s251 = sand.u32 %s106, 1
        %s252 = scalar_lea.sflag [#allocation7], %s251
        %s253 = sand.u32 %s106, 1
        %s254 = smul.addr %s253, 8
        %s255 = scalar_lea.vmem [#allocation6], %s254
        %p256 = pneg %p119
        %p257 = pneg %p116
        %p258 = pneg %p145
        %p259 = pneg %p142
        %s260 = sand.u32 %s132, 1
        %s261 = scalar_lea.sflag [#allocation5], %s260
        %s262 = sand.u32 %s132, 1
        %s263 = smul.addr %s262, 5
        %s264 = scalar_lea.vmem [#allocation8], %s263
        %s265 = smul.u32 %s27, 5
        %s266 = sadd.s32 %s265, %s28
        %p267 = scmp.lt.s32.totalorder %s266, 8
        %s268 = scalar_select %p267, %s266, 8
        %s269 = smul.u32 %s27, 5
        %s270 = sadd.s32 %s269, %s28
        %p271 = scmp.lt.s32.totalorder %s270, 8
        %s272 = scalar_select %p271, %s270, 8
        %s273 = smul.u32 %s27, 5
        %s274 = sadd.s32 %s273, %s28
        %s275 = smul.u32 %s274, 8
        %p276 = scmp.eq.s32.totalorder %s28, 0
        // Predicated region
        $region41: #{tpu_custom_call.1} parent=31 // pred_check
          %p277 = pneg %p276
        $region42: #{tpu_custom_call.1} parent=31 // pred_check_branch
          %279 = sbr.rel (%p277) target = $region44
        $region43: #{tpu_custom_call.1} parent=31 // pred_region
          %280 = vst [vmem:[#allocation2] sm:$0x1] 0.0
          %281 = vst [vmem:[#allocation2 + $0x1] sm:$0x1] 0.0
          %282 = vst [vmem:[#allocation2 + $0x2] sm:$0x1] 0.0
          %283 = vst [vmem:[#allocation2 + $0x3] sm:$0x1] 0.0
          %284 = vst [vmem:[#allocation2 + $0x4] sm:$0x1] 0.0
        $region44: #{tpu_custom_call.1} parent=31 // pred_fallthru
          _
        %s285 = sadd.s32 %s275, 8
        %p286 = scmp.le.s32.totalorder %s285, 65
        // Predicated region
        $region45: #{tpu_custom_call.1} parent=31 // pred_check
          %p287 = pneg %p286
        $region46: #{tpu_custom_call.1} parent=31 // pred_check_branch
          %289 = sbr.rel (%p287) target = $region48
        $region47: #{tpu_custom_call.1} parent=31 // pred_region
          %v290 = vld [vmem:[%s226] sm:$0xff]
          %v291 = vld [vmem:[%s226 + $0x8] sm:$0xff]
          %v292 = vld [vmem:[%s226 + $0x10] sm:$0xff]
          %v293 = vld [vmem:[%s226 + $0x18] sm:$0xff]
          %v294 = vld [vmem:[%s226 + $0x20] sm:$0xff]
          %v295 = vld [vmem:[%s236] sm:$0xff]
          %v296 = vsub.f32 %v295, %v290
          %v297 = vsub.f32 %v295, %v291
          %v298 = vsub.f32 %v295, %v292
          %v299 = vsub.f32 %v295, %v293
          %v300 = vsub.f32 %v295, %v294
          %v301 = vld [vmem:[%s0] sm:$0x1]
          %v302 = vld [vmem:[%s0 + $0x1] sm:$0x1]
          %v303 = vld [vmem:[%s0 + $0x2] sm:$0x1]
          %v304 = vld [vmem:[%s0 + $0x3] sm:$0x1]
          %v305 = vld [vmem:[%s0 + $0x4] sm:$0x1]
          %v311 = vperm.slane %v301, 0
          %v312 = vperm.slane %v302, 0
          %v313 = vperm.slane %v303, 0
          %v314 = vperm.slane %v304, 0
          %v315 = vperm.slane %v305, 0
          %316 = vset.pattern.permute.xlu0 0
          %317 = vperm.xlu0 %316, %v311
          %v318 = vpop.permute.xlu0 %317
          %320 = vset.pattern.permute.xlu0 0
          %321 = vperm.xlu0 %320, %v312
          %v322 = vpop.permute.xlu0 %321
          %324 = vset.pattern.permute.xlu0 0
          %325 = vperm.xlu0 %324, %v313
          %v326 = vpop.permute.xlu0 %325
          %328 = vset.pattern.permute.xlu0 0
          %329 = vperm.xlu0 %328, %v314
          %v330 = vpop.permute.xlu0 %329
          %332 = vset.pattern.permute.xlu0 0
          %333 = vperm.xlu0 %332, %v315
          %v334 = vpop.permute.xlu0 %333
          %v336 = vmul.f32 %v318, %v296
          %v337 = vmul.f32 %v322, %v297
          %v338 = vmul.f32 %v326, %v298
          %v339 = vmul.f32 %v330, %v299
          %v340 = vmul.f32 %v334, %v300
          %v341 = vmin.f32 %v296, 0.0
          %v342 = vmin.f32 %v297, 0.0
          %v343 = vmin.f32 %v298, 0.0
          %v344 = vmin.f32 %v299, 0.0
          %v345 = vmin.f32 %v300, 0.0
          %v346 = vsub.f32 %v336, %v341
          %v347 = vsub.f32 %v337, %v342
          %v348 = vsub.f32 %v338, %v343
          %v349 = vsub.f32 %v339, %v344
          %v350 = vsub.f32 %v340, %v345
          %v351 = vld [vmem:[#allocation2] sm:$0x1]
          %v352 = vld [vmem:[#allocation2 + $0x1] sm:$0x1]
          %v353 = vld [vmem:[#allocation2 + $0x2] sm:$0x1]
          %v354 = vld [vmem:[#allocation2 + $0x3] sm:$0x1]
          %v355 = vld [vmem:[#allocation2 + $0x4] sm:$0x1]
          %v356 = vrot.slane %v346, 4
          %v357 = vadd.f32 %v346, %v356
          %v358 = vrot.slane %v357, 2
          %v359 = vadd.f32 %v357, %v358
          %v360 = vrot.slane %v359, 1
          %v361 = vadd.f32 %v359, %v360
          %v362 = vrot.slane %v347, 4
          %v363 = vadd.f32 %v347, %v362
          %v364 = vrot.slane %v363, 2
          %v365 = vadd.f32 %v363, %v364
          %v366 = vrot.slane %v365, 1
          %v367 = vadd.f32 %v365, %v366
          %v368 = vrot.slane %v348, 4
          %v369 = vadd.f32 %v348, %v368
          %v370 = vrot.slane %v369, 2
          %v371 = vadd.f32 %v369, %v370
          %v372 = vrot.slane %v371, 1
          %v373 = vadd.f32 %v371, %v372
          %v374 = vrot.slane %v349, 4
          %v375 = vadd.f32 %v349, %v374
          %v376 = vrot.slane %v375, 2
          %v377 = vadd.f32 %v375, %v376
          %v378 = vrot.slane %v377, 1
          %v379 = vadd.f32 %v377, %v378
          %v380 = vrot.slane %v350, 4
          %v381 = vadd.f32 %v350, %v380
          %v382 = vrot.slane %v381, 2
          %v383 = vadd.f32 %v381, %v382
          %v384 = vrot.slane %v383, 1
          %v385 = vadd.f32 %v383, %v384
          %v386 = vadd.f32 %v351, %v361
          %v387 = vadd.f32 %v352, %v367
          %v388 = vadd.f32 %v353, %v373
          %v389 = vadd.f32 %v354, %v379
          %v390 = vadd.f32 %v355, %v385
          %391 = vst [vmem:[#allocation2] sm:$0x1] %v386
          %392 = vst [vmem:[#allocation2 + $0x1] sm:$0x1] %v387
          %393 = vst [vmem:[#allocation2 + $0x2] sm:$0x1] %v388
          %394 = vst [vmem:[#allocation2 + $0x3] sm:$0x1] %v389
          %395 = vst [vmem:[#allocation2 + $0x4] sm:$0x1] %v390
        $region48: #{tpu_custom_call.1} parent=31 // pred_fallthru
          _
        %p396 = scmp.lt.s32.totalorder %s275, 65
        %p397 = scmp.gt.s32.totalorder %s285, 65
        %p398 = pnand %p396, %p397
        %p399 = pneg %p398
        // Predicated region
        $region49: #{tpu_custom_call.1} parent=31 // pred_check
          _
        $region50: #{tpu_custom_call.1} parent=31 // pred_check_branch
          %401 = sbr.rel (%p398) target = $region52
        $region51: #{tpu_custom_call.1} parent=31 // pred_region
          %v402 = vld [vmem:[%s226] sm:$0xff]
          %v403 = vld [vmem:[%s226 + $0x8] sm:$0xff]
          %v404 = vld [vmem:[%s226 + $0x10] sm:$0xff]
          %v405 = vld [vmem:[%s226 + $0x18] sm:$0xff]
          %v406 = vld [vmem:[%s226 + $0x20] sm:$0xff]
          %v407 = vld [vmem:[%s236] sm:$0xff]
          %v408 = vsub.f32 %v407, %v402
          %v409 = vsub.f32 %v407, %v403
          %v410 = vsub.f32 %v407, %v404
          %v411 = vsub.f32 %v407, %v405
          %v412 = vsub.f32 %v407, %v406
          %v413 = vld [vmem:[%s0] sm:$0x1]
          %v414 = vld [vmem:[%s0 + $0x1] sm:$0x1]
          %v415 = vld [vmem:[%s0 + $0x2] sm:$0x1]
          %v416 = vld [vmem:[%s0 + $0x3] sm:$0x1]
          %v417 = vld [vmem:[%s0 + $0x4] sm:$0x1]
          %v423 = vperm.slane %v413, 0
          %v424 = vperm.slane %v414, 0
          %v425 = vperm.slane %v415, 0
          %v426 = vperm.slane %v416, 0
          %v427 = vperm.slane %v417, 0
          %428 = vset.pattern.permute.xlu0 0
          %429 = vperm.xlu0 %428, %v423
          %v430 = vpop.permute.xlu0 %429
          %432 = vset.pattern.permute.xlu0 0
          %433 = vperm.xlu0 %432, %v424
          %v434 = vpop.permute.xlu0 %433
          %436 = vset.pattern.permute.xlu0 0
          %437 = vperm.xlu0 %436, %v425
          %v438 = vpop.permute.xlu0 %437
          %440 = vset.pattern.permute.xlu0 0
          %441 = vperm.xlu0 %440, %v426
          %v442 = vpop.permute.xlu0 %441
          %444 = vset.pattern.permute.xlu0 0
          %445 = vperm.xlu0 %444, %v427
          %v446 = vpop.permute.xlu0 %445
          %v448 = vmul.f32 %v430, %v408
          %v449 = vmul.f32 %v434, %v409
          %v450 = vmul.f32 %v438, %v410
          %v451 = vmul.f32 %v442, %v411
          %v452 = vmul.f32 %v446, %v412
          %v453 = vmin.f32 %v408, 0.0
          %v454 = vmin.f32 %v409, 0.0
          %v455 = vmin.f32 %v410, 0.0
          %v456 = vmin.f32 %v411, 0.0
          %v457 = vmin.f32 %v412, 0.0
          %v458 = vsub.f32 %v448, %v453
          %v459 = vsub.f32 %v449, %v454
          %v460 = vsub.f32 %v450, %v455
          %v461 = vsub.f32 %v451, %v456
          %v462 = vsub.f32 %v452, %v457
          %v463 = vlaneseq
          %v464 = vshrl.u32 %v463, 7
          %v465 = vstv %s275
          %v466 = vadd.s32 %v465, %v464
          %vm467 = vcmp.lt.s32.totalorder %v466, 65
          %v468 = vsel %vm467, %v458, 0.0
          %v469 = vsel %vm467, %v459, 0.0
          %v470 = vsel %vm467, %v460, 0.0
          %v471 = vsel %vm467, %v461, 0.0
          %v472 = vsel %vm467, %v462, 0.0
          %v473 = vld [vmem:[#allocation2] sm:$0x1]
          %v474 = vld [vmem:[#allocation2 + $0x1] sm:$0x1]
          %v475 = vld [vmem:[#allocation2 + $0x2] sm:$0x1]
          %v476 = vld [vmem:[#allocation2 + $0x3] sm:$0x1]
          %v477 = vld [vmem:[#allocation2 + $0x4] sm:$0x1]
          %v478 = vrot.slane %v468, 4
          %v479 = vadd.f32 %v468, %v478
          %v480 = vrot.slane %v479, 2
          %v481 = vadd.f32 %v479, %v480
          %v482 = vrot.slane %v481, 1
          %v483 = vadd.f32 %v481, %v482
          %v484 = vrot.slane %v469, 4
          %v485 = vadd.f32 %v469, %v484
          %v486 = vrot.slane %v485, 2
          %v487 = vadd.f32 %v485, %v486
          %v488 = vrot.slane %v487, 1
          %v489 = vadd.f32 %v487, %v488
          %v490 = vrot.slane %v470, 4
          %v491 = vadd.f32 %v470, %v490
          %v492 = vrot.slane %v491, 2
          %v493 = vadd.f32 %v491, %v492
          %v494 = vrot.slane %v493, 1
          %v495 = vadd.f32 %v493, %v494
          %v496 = vrot.slane %v471, 4
          %v497 = vadd.f32 %v471, %v496
          %v498 = vrot.slane %v497, 2
          %v499 = vadd.f32 %v497, %v498
          %v500 = vrot.slane %v499, 1
          %v501 = vadd.f32 %v499, %v500
          %v502 = vrot.slane %v472, 4
          %v503 = vadd.f32 %v472, %v502
          %v504 = vrot.slane %v503, 2
          %v505 = vadd.f32 %v503, %v504
          %v506 = vrot.slane %v505, 1
          %v507 = vadd.f32 %v505, %v506
          %v508 = vadd.f32 %v473, %v483
          %v509 = vadd.f32 %v474, %v489
          %v510 = vadd.f32 %v475, %v495
          %v511 = vadd.f32 %v476, %v501
          %v512 = vadd.f32 %v477, %v507
          %513 = vst [vmem:[#allocation2] sm:$0x1] %v508
          %514 = vst [vmem:[#allocation2 + $0x1] sm:$0x1] %v509
          %515 = vst [vmem:[#allocation2 + $0x2] sm:$0x1] %v510
          %516 = vst [vmem:[#allocation2 + $0x3] sm:$0x1] %v511
          %517 = vst [vmem:[#allocation2 + $0x4] sm:$0x1] %v512
        $region52: #{tpu_custom_call.1} parent=31 // pred_fallthru
          _
        %p518 = scmp.eq.s32.totalorder %s28, 4
        // Predicated region
        $region53: #{tpu_custom_call.1} parent=31 // pred_check
          %p519 = pneg %p518
        $region54: #{tpu_custom_call.1} parent=31 // pred_check_branch
          %521 = sbr.rel (%p519) target = $region56
        $region55: #{tpu_custom_call.1} parent=31 // pred_region
          %v522 = vld [vmem:[#allocation2] sm:$0x1]
          %v523 = vld [vmem:[#allocation2 + $0x1] sm:$0x1]
          %v524 = vld [vmem:[#allocation2 + $0x2] sm:$0x1]
          %v525 = vld [vmem:[#allocation2 + $0x3] sm:$0x1]
          %v526 = vld [vmem:[#allocation2 + $0x4] sm:$0x1]
          %527 = vst [vmem:[%s264] sm:$0x1] %v522
          %528 = vst [vmem:[%s264 + $0x1] sm:$0x1] %v523
          %529 = vst [vmem:[%s264 + $0x2] sm:$0x1] %v524
          %530 = vst [vmem:[%s264 + $0x3] sm:$0x1] %v525
          %531 = vst [vmem:[%s264 + $0x4] sm:$0x1] %v526
        $region56: #{tpu_custom_call.1} parent=31 // pred_fallthru
          _
        %s532 = sand.u32 %s132, 1
        %s533 = scalar_lea.sflag [#allocation5], %s532
        %s534 = sand.u32 %s132, 1
        %s535 = smul.addr %s534, 5
        %s536 = scalar_lea.vmem [#allocation8], %s535
        // Predicated region
        $region57: #{tpu_custom_call.1} parent=31 // pred_check
          %p537 = pneg %p142
        $region58: #{tpu_custom_call.1} parent=31 // pred_check_branch
          %539 = sbr.rel (%p537) target = $region60
        $region59: #{tpu_custom_call.1} parent=31 // pred_region
          %541 = vsyncadd %s533, 0
          %s542 = smul.addr %s27, 5
          %s543 = scalar_lea.hbm %s3, %s542
          %s544 = sshll.u32 %s536, 4
          %s545 = int_to_ptr.vmem [resolvable:$true] %s544
          %s546 = sshll.u32 %s543, 4
          %s547 = int_to_ptr.hbm [resolvable:$true] %s546
          %552 = dma.vmem_to_hbm [thread:$0]  %s545, 80, %s547, %s533, 16, 16, 1
        $region60: #{tpu_custom_call.1} parent=31 // pred_fallthru
          _
      $region32: #{tpu_custom_call.1} parent=5 // pred_fallthru
        _
      %p553 = scmp.le.s32.totalorder 2, %s18
      // Predicated region
      $region61: #{tpu_custom_call.1} parent=5 // pred_check
        %p554 = pneg %p553
      $region62: #{tpu_custom_call.1} parent=5 // pred_check_branch
        %556 = sbr.rel (%p554) target = $region64
      $region63: #{tpu_custom_call.1} parent=5 // pred_region
        %s557 = ssub.s32 %s18, 2
        // Predicated region
        $region65: #{tpu_custom_call.1} parent=63 // pred_check
          %p558 = pneg %p148
        $region66: #{tpu_custom_call.1} parent=63 // pred_check_branch
          %560 = sbr.rel (%p558) target = $region68
        $region67: #{tpu_custom_call.1} parent=63 // pred_region
          %s561 = sand.u32 %s133, 1
          %s562 = scalar_lea.sflag [#allocation5], %s561
          %s563 = sand.u32 %s133, 1
          %s564 = smul.addr %s563, 5
          %s565 = scalar_lea.vmem [#allocation8], %s564
          %567 = dma.done %s562, 80
        $region68: #{tpu_custom_call.1} parent=63 // pred_fallthru
          _
      $region64: #{tpu_custom_call.1} parent=5 // pred_fallthru
        _
    $region6: #{tpu_custom_call.1} parent=1 // loop_footer
      %s22 = sadd.s32 1, %s18
    $region7: #{tpu_custom_call.1} parent=1 // loop_footer_branch
      %17 = sbr.rel target = $region3
    $region8: #{tpu_custom_call.1} parent=1 // loop_exit
      _
    %568 = vsyncpa [#allocation4], 1
    %s569 = scalar_lea.sflag [#allocation4], 1
    %570 = vsyncpa %s569, 1
    %571 = vsyncpa [#allocation7], 1
    %s572 = scalar_lea.sflag [#allocation7], 1
    %573 = vsyncpa %s572, 1
    %574 = vsyncpa [#allocation5], 1
    %s575 = scalar_lea.sflag [#allocation5], 1
    %576 = vsyncpa %s575, 1

</llo_original>
